<compile_context>
chip_gen: v7x
topology: tpu7x:2x2x1
jax: 0.10.0
libtpu: 0.0.40
codegen_flags: <defaults>
</compile_context>

<pallas_src>
import functools

import jax
import jax.numpy as jnp
from jax.experimental import pallas as pl
from jax.experimental.pallas import tpu as pltpu


def mlp_kernel(x_ref, w1_ref, b1_ref, w2_ref, b2_ref, o_ref):
    # hidden = relu(x @ W1 + b1); kept as a value in vregs/VMEM (no HBM trip).
    h = jnp.dot(x_ref[...], w1_ref[...], preferred_element_type=jnp.float32)
    h = jnp.maximum(h + b1_ref[...], 0.0)          # f32 epilogue (v5e-friendly)
    # out = hidden @ W2 + b2  (lane-dense 128-wide store)
    o = jnp.dot(h, w2_ref[...], preferred_element_type=jnp.float32)
    o_ref[...] = (o + b2_ref[...]).astype(o_ref.dtype)


def _round_up(n, m):
    return ((n + m - 1) // m) * m


@functools.partial(jax.jit, static_argnames=("tm",))
def mlp_forward(x, w1, b1, w2, b2, *, tm=128):
    """x: (B, d_in); w1: (d_in, d_hid); b1: (d_hid,); w2: (d_hid, d_out); b2: (d_out,)."""
    B, d_in = x.shape
    d_hid = w1.shape[1]
    d_out = w2.shape[1]

    # Pad to lane/sublane-friendly shapes (zeros are mathematically inert for
    # the contractions; padded output rows/cols are sliced off afterwards).
    d_in_p = _round_up(d_in, 128)
    d_out_p = _round_up(d_out, 128)
    b_p = _round_up(B, tm)

    x_p = jnp.pad(x, ((0, b_p - B), (0, d_in_p - d_in)))
    w1_p = jnp.pad(w1, ((0, d_in_p - d_in), (0, 0)))
    b1_p = b1.reshape(1, d_hid)
    w2_p = jnp.pad(w2, ((0, 0), (0, d_out_p - d_out)))
    b2_p = jnp.pad(b2.reshape(1, d_out), ((0, 0), (0, d_out_p - d_out)))

    out_p = pl.pallas_call(
        mlp_kernel,
        out_shape=jax.ShapeDtypeStruct((b_p, d_out_p), x.dtype),
        grid=(b_p // tm,),
        in_specs=[
            pl.BlockSpec((tm, d_in_p), lambda i: (i, 0)),      # x tile, pipelined
            pl.BlockSpec((d_in_p, d_hid), lambda i: (0, 0)),    # W1 resident
            pl.BlockSpec((1, d_hid), lambda i: (0, 0)),         # b1 resident
            pl.BlockSpec((d_hid, d_out_p), lambda i: (0, 0)),   # W2 resident
            pl.BlockSpec((1, d_out_p), lambda i: (0, 0)),       # b2 resident
        ],
        out_specs=pl.BlockSpec((tm, d_out_p), lambda i: (i, 0)),
        compiler_params=pltpu.CompilerParams(
            dimension_semantics=("parallel",),                  # v7x: 2 TCs share batch
        ),
    )(x_p, w1_p, b1_p, w2_p, b2_p)

    return out_p[:B, :d_out]


if __name__ == "__main__":
    key = jax.random.PRNGKey(0)
    kx, k1, kb1, k2, kb2 = jax.random.split(key, 5)

    B, D_IN, D_HID, D_OUT = 2, 20, 256, 10

    # Matches the PyTorch script: X = torch.rand(2, 20)
    x = jax.random.uniform(kx, (B, D_IN), dtype=jnp.float32)

    # PyTorch-Linear-style uniform init, stored as [in, out] so kernel does x @ W + b.
    bound1 = 1.0 / (D_IN ** 0.5)
    w1 = jax.random.uniform(k1, (D_IN, D_HID), dtype=jnp.float32,
                            minval=-bound1, maxval=bound1)
    b1 = jax.random.uniform(kb1, (D_HID,), dtype=jnp.float32,
                            minval=-bound1, maxval=bound1)

    bound2 = 1.0 / (D_HID ** 0.5)
    w2 = jax.random.uniform(k2, (D_HID, D_OUT), dtype=jnp.float32,
                            minval=-bound2, maxval=bound2)
    b2 = jax.random.uniform(kb2, (D_OUT,), dtype=jnp.float32,
                            minval=-bound2, maxval=bound2)

    out = mlp_forward(x, w1, b1, w2, b2)
    jax.block_until_ready(out)

    # Correctness check against plain-JAX reference of the same forward pass.
    ref = jnp.maximum(x @ w1 + b1[None, :], 0.0) @ w2 + b2[None, :]
    assert out.shape == (B, D_OUT)
    assert jnp.allclose(out, ref, atol=1e-5, rtol=1e-5)

    print("KERNEL_OK")
</pallas_src>

<mosaic_0001>
module attributes {stable_mosaic.version = 11 : i64} {
  func.func @mlp_kernel(%arg0: i32, %arg1: memref<128x128xf32, #tpu.memory_space<vmem>>, %arg2: memref<128x256xf32, #tpu.memory_space<vmem>>, %arg3: memref<1x256xf32, #tpu.memory_space<vmem>>, %arg4: memref<256x128xf32, #tpu.memory_space<vmem>>, %arg5: memref<1x128xf32, #tpu.memory_space<vmem>>, %arg6: memref<128x128xf32, #tpu.memory_space<vmem>>) attributes {dimension_semantics = [#tpu.dimension_semantics<parallel>], iteration_bounds = array<i64: 1>, scalar_prefetch = 0 : i64, scratch_operands = 0 : i64, tpu.core_type = #tpu.core_type<tc>, window_params = [{transform_indices = @transform_0, window_bounds = array<i64: 128, 128>}, {pipeline_mode = #tpu.pipeline_mode<synchronous>, transform_indices = @transform_1, window_bounds = array<i64: 128, 256>}, {pipeline_mode = #tpu.pipeline_mode<synchronous>, transform_indices = @transform_2, window_bounds = array<i64: 1, 256>}, {pipeline_mode = #tpu.pipeline_mode<synchronous>, transform_indices = @transform_3, window_bounds = array<i64: 256, 128>}, {pipeline_mode = #tpu.pipeline_mode<synchronous>, transform_indices = @transform_4, window_bounds = array<i64: 1, 128>}, {transform_indices = @transform_5, window_bounds = array<i64: 128, 128>}]} {
    %c0 = arith.constant 0 : index
    %c0_0 = arith.constant 0 : index
    %0 = vector.load %arg1[%c0, %c0_0] : memref<128x128xf32, #tpu.memory_space<vmem>>, vector<128x128xf32>
    %c0_1 = arith.constant 0 : index
    %c0_2 = arith.constant 0 : index
    %1 = vector.load %arg2[%c0_1, %c0_2] : memref<128x256xf32, #tpu.memory_space<vmem>>, vector<128x256xf32>
    %cst = arith.constant dense<0.000000e+00> : vector<128x256xf32>
    %2 = tpu.matmul %0, %1, %cst {dimension_numbers = #tpu.dot_dimension_numbers<[1], [0], [0], [1], [0, 0, 1, 1], [], []>} : vector<128x128xf32>, vector<128x256xf32>, vector<128x256xf32> -> vector<128x256xf32>
    %c0_3 = arith.constant 0 : index
    %c0_4 = arith.constant 0 : index
    %3 = vector.load %arg3[%c0_3, %c0_4] : memref<1x256xf32, #tpu.memory_space<vmem>>, vector<1x256xf32>
    %4 = vector.broadcast %3 : vector<1x256xf32> to vector<128x256xf32>
    %5 = arith.addf %2, %4 : vector<128x256xf32>
    %cst_5 = arith.constant 0.000000e+00 : f32
    %6 = vector.broadcast %cst_5 : f32 to vector<128x256xf32>
    %7 = arith.maximumf %5, %6 : vector<128x256xf32>
    %c0_6 = arith.constant 0 : index
    %c0_7 = arith.constant 0 : index
    %8 = vector.load %arg4[%c0_6, %c0_7] : memref<256x128xf32, #tpu.memory_space<vmem>>, vector<256x128xf32>
    %cst_8 = arith.constant dense<0.000000e+00> : vector<128x128xf32>
    %9 = tpu.matmul %7, %8, %cst_8 {dimension_numbers = #tpu.dot_dimension_numbers<[1], [0], [0], [1], [0, 0, 1, 1], [], []>} : vector<128x256xf32>, vector<256x128xf32>, vector<128x128xf32> -> vector<128x128xf32>
    %c0_9 = arith.constant 0 : index
    %c0_10 = arith.constant 0 : index
    %10 = vector.load %arg5[%c0_9, %c0_10] : memref<1x128xf32, #tpu.memory_space<vmem>>, vector<1x128xf32>
    %11 = vector.broadcast %10 : vector<1x128xf32> to vector<128x128xf32>
    %12 = arith.addf %9, %11 : vector<128x128xf32>
    %c0_11 = arith.constant 0 : index
    %c0_12 = arith.constant 0 : index
    %13 = vector.load %arg6[%c0_11, %c0_12] : memref<128x128xf32, #tpu.memory_space<vmem>>, vector<128x128xf32>
    tpu.vector_store %arg6[%c0_11, %c0_12], %12 {strides = array<i32>} : memref<128x128xf32, #tpu.memory_space<vmem>>, vector<128x128xf32>,
    return
  }
  func.func @transform_0(%arg0: i32) -> (i32, i32) {
    %c0_i32 = arith.constant 0 : i32
    %c0_i32_0 = arith.constant 0 : i32
    return %arg0, %c0_i32 : i32, i32
  }
  func.func @transform_1(%arg0: i32) -> (i32, i32) {
    %c0_i32 = arith.constant 0 : i32
    %c0_i32_0 = arith.constant 0 : i32
    %c0_i32_1 = arith.constant 0 : i32
    return %c0_i32, %c0_i32_0 : i32, i32
  }
  func.func @transform_2(%arg0: i32) -> (i32, i32) {
    %c0_i32 = arith.constant 0 : i32
    %c0_i32_0 = arith.constant 0 : i32
    %c0_i32_1 = arith.constant 0 : i32
    return %c0_i32, %c0_i32_0 : i32, i32
  }
  func.func @transform_3(%arg0: i32) -> (i32, i32) {
    %c0_i32 = arith.constant 0 : i32
    %c0_i32_0 = arith.constant 0 : i32
    %c0_i32_1 = arith.constant 0 : i32
    return %c0_i32, %c0_i32_0 : i32, i32
  }
  func.func @transform_4(%arg0: i32) -> (i32, i32) {
    %c0_i32 = arith.constant 0 : i32
    %c0_i32_0 = arith.constant 0 : i32
    %c0_i32_1 = arith.constant 0 : i32
    return %c0_i32, %c0_i32_0 : i32, i32
  }
  func.func @transform_5(%arg0: i32) -> (i32, i32) {
    %c0_i32 = arith.constant 0 : i32
    %c0_i32_0 = arith.constant 0 : i32
    return %arg0, %c0_i32 : i32, i32
  }
}

</mosaic_0001>

<llo_original>
// kernel: mlp_forward.1
$region0: #{mlp_forward.1}
  #allocation0 [shape = 'u32[]', space=smem, size = 0x4, offset = 0x4, fixed_abs, tag = 'smem constant byte address 0x4 - core index']
  #allocation1 [shape = 'u32[144,128]{1,0:T(1,128)}', space=vmem, size = 0x12000, scoped, tag = 'internal scratch']
  %s0 = inlined_call_operand.vmem [shape: f32[128,128], index: 0, kind: input, shape index: {}]
  %s1 = inlined_call_operand.vmem [shape: f32[128,256], index: 1, kind: input, shape index: {}]
  %s2 = inlined_call_operand.vmem [shape: f32[1,256], index: 2, kind: input, shape index: {}]
  %s3 = inlined_call_operand.vmem [shape: f32[256,128], index: 3, kind: input, shape index: {}]
  %s4 = inlined_call_operand.vmem [shape: f32[1,128], index: 4, kind: input, shape index: {}]
  %s5 = inlined_call_operand.vmem [shape: f32[128,128], index: 5, kind: output, shape index: {}]
  %s6 = sld [smem:[#allocation0]]
  $region30: #{mlp_forward.1} parent=0
    _
  %s8 = ssub.s32 1, %s6
  %s9 = scalar_select 0, %s8, %s6
  // Predicated region
  $region2: #{mlp_forward.1} parent=0 // pred_check
    _
  $region3: #{mlp_forward.1} parent=0 // pred_check_branch
    %11 = sbr.rel (0) target = $region5
  $region4: #{mlp_forward.1} parent=0 // pred_region
    _
  $region5: #{mlp_forward.1} parent=0 // pred_fallthru
    _
  // Predicated region
  $region6: #{mlp_forward.1} parent=0 // pred_check
    _
  $region7: #{mlp_forward.1} parent=0 // pred_check_branch
    %13 = sbr.rel (0) target = $region9
  $region8: #{mlp_forward.1} parent=0 // pred_region
    _
  $region9: #{mlp_forward.1} parent=0 // pred_fallthru
    _
  // Predicated region
  $region10: #{mlp_forward.1} parent=0 // pred_check
    _
  $region11: #{mlp_forward.1} parent=0 // pred_check_branch
    %15 = sbr.rel (0) target = $region13
  $region12: #{mlp_forward.1} parent=0 // pred_region
    _
  $region13: #{mlp_forward.1} parent=0 // pred_fallthru
    _
  // Predicated region
  $region14: #{mlp_forward.1} parent=0 // pred_check
    _
  $region15: #{mlp_forward.1} parent=0 // pred_check_branch
    %17 = sbr.rel (0) target = $region17
  $region16: #{mlp_forward.1} parent=0 // pred_region
    _
  $region17: #{mlp_forward.1} parent=0 // pred_fallthru
    _
  // Predicated region
  $region18: #{mlp_forward.1} parent=0 // pred_check
    _
  $region19: #{mlp_forward.1} parent=0 // pred_check_branch
    %19 = sbr.rel (0) target = $region21
  $region20: #{mlp_forward.1} parent=0 // pred_region
    _
  $region21: #{mlp_forward.1} parent=0 // pred_fallthru
    _
  %v20 = vld [vmem:[%s0] sm:$0xff]
  %v21 = vld [vmem:[%s0 + $0x8] sm:$0xff]
  %v22 = vld [vmem:[%s0 + $0x10] sm:$0xff]
  %v23 = vld [vmem:[%s0 + $0x18] sm:$0xff]
  %v24 = vld [vmem:[%s0 + $0x20] sm:$0xff]
  %v25 = vld [vmem:[%s0 + $0x28] sm:$0xff]
  %v26 = vld [vmem:[%s0 + $0x30] sm:$0xff]
  %v27 = vld [vmem:[%s0 + $0x38] sm:$0xff]
  %v28 = vld [vmem:[%s0 + $0x40] sm:$0xff]
  %v29 = vld [vmem:[%s0 + $0x48] sm:$0xff]
  %v30 = vld [vmem:[%s0 + $0x50] sm:$0xff]
  %v31 = vld [vmem:[%s0 + $0x58] sm:$0xff]
  %v32 = vld [vmem:[%s0 + $0x60] sm:$0xff]
  %v33 = vld [vmem:[%s0 + $0x68] sm:$0xff]
  %v34 = vld [vmem:[%s0 + $0x70] sm:$0xff]
  %v35 = vld [vmem:[%s0 + $0x78] sm:$0xff]
  %v36 = vld [vmem:[%s1] sm:$0xff]
  %v37 = vld [vmem:[%s1 + $0x8] sm:$0xff]
  %v38 = vld [vmem:[%s1 + $0x10] sm:$0xff]
  %v39 = vld [vmem:[%s1 + $0x18] sm:$0xff]
  %v40 = vld [vmem:[%s1 + $0x20] sm:$0xff]
  %v41 = vld [vmem:[%s1 + $0x28] sm:$0xff]
  %v42 = vld [vmem:[%s1 + $0x30] sm:$0xff]
  %v43 = vld [vmem:[%s1 + $0x38] sm:$0xff]
  %v44 = vld [vmem:[%s1 + $0x40] sm:$0xff]
  %v45 = vld [vmem:[%s1 + $0x48] sm:$0xff]
  %v46 = vld [vmem:[%s1 + $0x50] sm:$0xff]
  %v47 = vld [vmem:[%s1 + $0x58] sm:$0xff]
  %v48 = vld [vmem:[%s1 + $0x60] sm:$0xff]
  %v49 = vld [vmem:[%s1 + $0x68] sm:$0xff]
  %v50 = vld [vmem:[%s1 + $0x70] sm:$0xff]
  %v51 = vld [vmem:[%s1 + $0x78] sm:$0xff]
  %v52 = vld [vmem:[%s1 + $0x80] sm:$0xff]
  %v53 = vld [vmem:[%s1 + $0x88] sm:$0xff]
  %v54 = vld [vmem:[%s1 + $0x90] sm:$0xff]
  %v55 = vld [vmem:[%s1 + $0x98] sm:$0xff]
  %v56 = vld [vmem:[%s1 + $0xa0] sm:$0xff]
  %v57 = vld [vmem:[%s1 + $0xa8] sm:$0xff]
  %v58 = vld [vmem:[%s1 + $0xb0] sm:$0xff]
  %v59 = vld [vmem:[%s1 + $0xb8] sm:$0xff]
  %v60 = vld [vmem:[%s1 + $0xc0] sm:$0xff]
  %v61 = vld [vmem:[%s1 + $0xc8] sm:$0xff]
  %v62 = vld [vmem:[%s1 + $0xd0] sm:$0xff]
  %v63 = vld [vmem:[%s1 + $0xd8] sm:$0xff]
  %v64 = vld [vmem:[%s1 + $0xe0] sm:$0xff]
  %v65 = vld [vmem:[%s1 + $0xe8] sm:$0xff]
  %v66 = vld [vmem:[%s1 + $0xf0] sm:$0xff]
  %v67 = vld [vmem:[%s1 + $0xf8] sm:$0xff]
  %v68 = vld [vmem:[%s2] sm:$0x3]
  %v70 = vlaneseq
  %v71 = vshrl.u32 %v70, 7
  %v72 = vsub.s32 0, %v71
  %v73 = vrot.slane %v68, %v72
  %v74 = vlaneseq
  %v75 = vshrl.u32 %v74, 7
  %v76 = vsub.s32 1, %v75
  %v77 = vrot.slane %v68, %v76
  %80 = vmatprep.subr.mxu0 %v37
  %81 = vmatpush1.msra.mxu0 %v36
  %82 = vmatprep.subr.mxu0 %v39
  %83 = vmatpush1.msra.mxu0 %v38
  %84 = vmatprep.subr.mxu0 %v41
  %85 = vmatpush1.msra.mxu0 %v40
  %86 = vmatprep.subr.mxu0 %v43
  %87 = vmatpush1.msra.mxu0 %v42
  %88 = vmatprep.subr.mxu0 %v45
  %89 = vmatpush1.msra.mxu0 %v44
  %90 = vmatprep.subr.mxu0 %v47
  %91 = vmatpush1.msra.mxu0 %v46
  %92 = vmatprep.subr.mxu0 %v49
  %93 = vmatpush1.msra.mxu0 %v48
  %94 = vmatprep.subr.mxu0 %v51
  %95 = vmatpush1.msra.mxu0 %v50
  %96 = vmatprep.subr.mxu0 %v53
  %97 = vmatpush1.msra.mxu0 %v52
  %98 = vmatprep.subr.mxu0 %v55
  %99 = vmatpush1.msra.mxu0 %v54
  %100 = vmatprep.subr.mxu0 %v57
  %101 = vmatpush1.msra.mxu0 %v56
  %102 = vmatprep.subr.mxu0 %v59
  %103 = vmatpush1.msra.mxu0 %v58
  %104 = vmatprep.subr.mxu0 %v61
  %105 = vmatpush1.msra.mxu0 %v60
  %106 = vmatprep.subr.mxu0 %v63
  %107 = vmatpush1.msra.mxu0 %v62
  %108 = vmatprep.subr.mxu0 %v65
  %109 = vmatpush1.msra.mxu0 %v64
  %110 = vmatprep.subr.mxu0 %v67
  %111 = vmatpush1.msra.mxu0 %v66
  %112 = vmatprep.subr.mxu0 0.0
  %113 = vmatpush1.msra.mxu0 0.0
  %114 = vmatprep.subr.mxu0 0.0
  %115 = vmatpush1.msra.mxu0 0.0
  %116 = vmatprep.subr.mxu0 0.0
  %117 = vmatpush1.msra.mxu0 0.0
  %118 = vmatprep.subr.mxu0 0.0
  %119 = vmatpush1.msra.mxu0 0.0
  %120 = vmatprep.subr.mxu0 0.0
  %121 = vmatpush1.msra.mxu0 0.0
  %122 = vmatprep.subr.mxu0 0.0
  %123 = vmatpush1.msra.mxu0 0.0
  %124 = vmatprep.subr.mxu0 0.0
  %125 = vmatpush1.msra.mxu0 0.0
  %126 = vmatprep.subr.mxu0 0.0
  %127 = vmatpush1.msra.mxu0 0.0
  %128 = vmatprep.subr.mxu0 0.0
  %129 = vmatpush1.msra.mxu0 0.0
  %130 = vmatprep.subr.mxu0 0.0
  %131 = vmatpush1.msra.mxu0 0.0
  %132 = vmatprep.subr.mxu0 0.0
  %133 = vmatpush1.msra.mxu0 0.0
  %134 = vmatprep.subr.mxu0 0.0
  %135 = vmatpush1.msra.mxu0 0.0
  %136 = vmatprep.subr.mxu0 0.0
  %137 = vmatpush1.msra.mxu0 0.0
  %138 = vmatprep.subr.mxu0 0.0
  %139 = vmatpush1.msra.mxu0 0.0
  %140 = vmatprep.subr.mxu0 0.0
  %141 = vmatpush1.msra.mxu0 0.0
  %142 = vmatprep.subr.mxu0 0.0
  %143 = vmatpush1.msra.mxu0 0.0
  %144 = vmatprep.mubr.f32.mxu0 0.0
  %145 = vmatmul.mubr.f32.gmra.mrb[0].mxu0 %v20
  %v146 = vpop.f32.mrb[0].mxu0
  %v147 = vadd.f32 %v73, %v146
  %v148 = vpop.f32.mrb[0].mxu0
  %v149 = vadd.f32 %v77, %v148
  %150 = vmatprep.mubr.f32.mxu0 0.0
  %151 = vmatmul.mubr.f32.gmra.mrb[0].mxu0 %v21
  %v152 = vpop.f32.mrb[0].mxu0
  %v153 = vadd.f32 %v73, %v152
  %v154 = vpop.f32.mrb[0].mxu0
  %v155 = vadd.f32 %v77, %v154
  %156 = vmatprep.mubr.f32.mxu0 0.0
  %157 = vmatmul.mubr.f32.gmra.mrb[0].mxu0 %v22
  %v158 = vpop.f32.mrb[0].mxu0
  %v159 = vadd.f32 %v73, %v158
  %v160 = vpop.f32.mrb[0].mxu0
  %v161 = vadd.f32 %v77, %v160
  %162 = vmatprep.mubr.f32.mxu0 0.0
  %163 = vmatmul.mubr.f32.gmra.mrb[0].mxu0 %v23
  %v164 = vpop.f32.mrb[0].mxu0
  %v165 = vadd.f32 %v73, %v164
  %v166 = vpop.f32.mrb[0].mxu0
  %v167 = vadd.f32 %v77, %v166
  %168 = vmatprep.mubr.f32.mxu0 0.0
  %169 = vmatmul.mubr.f32.gmra.mrb[0].mxu0 %v24
  %v170 = vpop.f32.mrb[0].mxu0
  %v171 = vadd.f32 %v73, %v170
  %v172 = vpop.f32.mrb[0].mxu0
  %v173 = vadd.f32 %v77, %v172
  %174 = vmatprep.mubr.f32.mxu0 0.0
  %175 = vmatmul.mubr.f32.gmra.mrb[0].mxu0 %v25
  %v176 = vpop.f32.mrb[0].mxu0
  %v177 = vadd.f32 %v73, %v176
  %v178 = vpop.f32.mrb[0].mxu0
  %v179 = vadd.f32 %v77, %v178
  %180 = vmatprep.mubr.f32.mxu0 0.0
  %181 = vmatmul.mubr.f32.gmra.mrb[0].mxu0 %v26
  %v182 = vpop.f32.mrb[0].mxu0
  %v183 = vadd.f32 %v73, %v182
  %v184 = vpop.f32.mrb[0].mxu0
  %v185 = vadd.f32 %v77, %v184
  %186 = vmatprep.mubr.f32.mxu0 0.0
  %187 = vmatmul.mubr.f32.gmra.mrb[0].mxu0 %v27
  %v188 = vpop.f32.mrb[0].mxu0
  %v189 = vadd.f32 %v73, %v188
  %v190 = vpop.f32.mrb[0].mxu0
  %v191 = vadd.f32 %v77, %v190
  %192 = vmatprep.mubr.f32.mxu0 0.0
  %193 = vmatmul.mubr.f32.gmra.mrb[0].mxu0 %v28
  %v194 = vpop.f32.mrb[0].mxu0
  %v195 = vadd.f32 %v73, %v194
  %v196 = vpop.f32.mrb[0].mxu0
  %v197 = vadd.f32 %v77, %v196
  %198 = vmatprep.mubr.f32.mxu0 0.0
  %199 = vmatmul.mubr.f32.gmra.mrb[0].mxu0 %v29
  %v200 = vpop.f32.mrb[0].mxu0
  %v201 = vadd.f32 %v73, %v200
  %v202 = vpop.f32.mrb[0].mxu0
  %v203 = vadd.f32 %v77, %v202
  %204 = vmatprep.mubr.f32.mxu0 0.0
  %205 = vmatmul.mubr.f32.gmra.mrb[0].mxu0 %v30
  %v206 = vpop.f32.mrb[0].mxu0
  %v207 = vadd.f32 %v73, %v206
  %v208 = vpop.f32.mrb[0].mxu0
  %v209 = vadd.f32 %v77, %v208
  %210 = vmatprep.mubr.f32.mxu0 0.0
  %211 = vmatmul.mubr.f32.gmra.mrb[0].mxu0 %v31
  %v212 = vpop.f32.mrb[0].mxu0
  %v213 = vadd.f32 %v73, %v212
  %v214 = vpop.f32.mrb[0].mxu0
  %v215 = vadd.f32 %v77, %v214
  %216 = vmatprep.mubr.f32.mxu0 0.0
  %217 = vmatmul.mubr.f32.gmra.mrb[0].mxu0 %v32
  %v218 = vpop.f32.mrb[0].mxu0
  %v219 = vadd.f32 %v73, %v218
  %v220 = vpop.f32.mrb[0].mxu0
  %v221 = vadd.f32 %v77, %v220
  %222 = vmatprep.mubr.f32.mxu0 0.0
  %223 = vmatmul.mubr.f32.gmra.mrb[0].mxu0 %v33
  %v224 = vpop.f32.mrb[0].mxu0
  %v225 = vadd.f32 %v73, %v224
  %v226 = vpop.f32.mrb[0].mxu0
  %v227 = vadd.f32 %v77, %v226
  %228 = vmatprep.mubr.f32.mxu0 0.0
  %229 = vmatmul.mubr.f32.gmra.mrb[0].mxu0 %v34
  %v230 = vpop.f32.mrb[0].mxu0
  %v231 = vadd.f32 %v73, %v230
  %v232 = vpop.f32.mrb[0].mxu0
  %v233 = vadd.f32 %v77, %v232
  %234 = vmatprep.mubr.f32.mxu0 0.0
  %235 = vmatmul.mubr.f32.gmra.mrb[0].mxu0 %v35
  %v236 = vpop.f32.mrb[0].mxu0
  %v237 = vadd.f32 %v73, %v236
  %v238 = vpop.f32.mrb[0].mxu0
  %v239 = vadd.f32 %v77, %v238
  %240 = vdwg.mxu0
  %v241 = vmax.f32 %v147, 0.0
  %v242 = vmax.f32 %v149, 0.0
  %v243 = vmax.f32 %v153, 0.0
  %v244 = vmax.f32 %v155, 0.0
  %v245 = vmax.f32 %v159, 0.0
  %v246 = vmax.f32 %v161, 0.0
  %v247 = vmax.f32 %v165, 0.0
  %v248 = vmax.f32 %v167, 0.0
  %v249 = vmax.f32 %v171, 0.0
  %v250 = vmax.f32 %v173, 0.0
  %v251 = vmax.f32 %v177, 0.0
  %v252 = vmax.f32 %v179, 0.0
  %v253 = vmax.f32 %v183, 0.0
  %v254 = vmax.f32 %v185, 0.0
  %v255 = vmax.f32 %v189, 0.0
  %v256 = vmax.f32 %v191, 0.0
  %v257 = vmax.f32 %v195, 0.0
  %v258 = vmax.f32 %v197, 0.0
  %v259 = vmax.f32 %v201, 0.0
  %v260 = vmax.f32 %v203, 0.0
  %v261 = vmax.f32 %v207, 0.0
  %v262 = vmax.f32 %v209, 0.0
  %v263 = vmax.f32 %v213, 0.0
  %v264 = vmax.f32 %v215, 0.0
  %v265 = vmax.f32 %v219, 0.0
  %v266 = vmax.f32 %v221, 0.0
  %v267 = vmax.f32 %v225, 0.0
  %v268 = vmax.f32 %v227, 0.0
  %v269 = vmax.f32 %v231, 0.0
  %v270 = vmax.f32 %v233, 0.0
  %v271 = vmax.f32 %v237, 0.0
  %v272 = vmax.f32 %v239, 0.0
  %v273 = vld [vmem:[%s3] sm:$0xff]
  %v274 = vld [vmem:[%s3 + $0x8] sm:$0xff]
  %v275 = vld [vmem:[%s3 + $0x10] sm:$0xff]
  %v276 = vld [vmem:[%s3 + $0x18] sm:$0xff]
  %v277 = vld [vmem:[%s3 + $0x20] sm:$0xff]
  %v278 = vld [vmem:[%s3 + $0x28] sm:$0xff]
  %v279 = vld [vmem:[%s3 + $0x30] sm:$0xff]
  %v280 = vld [vmem:[%s3 + $0x38] sm:$0xff]
  %v281 = vld [vmem:[%s3 + $0x40] sm:$0xff]
  %v282 = vld [vmem:[%s3 + $0x48] sm:$0xff]
  %v283 = vld [vmem:[%s3 + $0x50] sm:$0xff]
  %v284 = vld [vmem:[%s3 + $0x58] sm:$0xff]
  %v285 = vld [vmem:[%s3 + $0x60] sm:$0xff]
  %v286 = vld [vmem:[%s3 + $0x68] sm:$0xff]
  %v287 = vld [vmem:[%s3 + $0x70] sm:$0xff]
  %v288 = vld [vmem:[%s3 + $0x78] sm:$0xff]
  %v289 = vld [vmem:[%s3 + $0x80] sm:$0xff]
  %v290 = vld [vmem:[%s3 + $0x88] sm:$0xff]
  %v291 = vld [vmem:[%s3 + $0x90] sm:$0xff]
  %v292 = vld [vmem:[%s3 + $0x98] sm:$0xff]
  %v293 = vld [vmem:[%s3 + $0xa0] sm:$0xff]
  %v294 = vld [vmem:[%s3 + $0xa8] sm:$0xff]
  %v295 = vld [vmem:[%s3 + $0xb0] sm:$0xff]
  %v296 = vld [vmem:[%s3 + $0xb8] sm:$0xff]
  %v297 = vld [vmem:[%s3 + $0xc0] sm:$0xff]
  %v298 = vld [vmem:[%s3 + $0xc8] sm:$0xff]
  %v299 = vld [vmem:[%s3 + $0xd0] sm:$0xff]
  %v300 = vld [vmem:[%s3 + $0xd8] sm:$0xff]
  %v301 = vld [vmem:[%s3 + $0xe0] sm:$0xff]
  %v302 = vld [vmem:[%s3 + $0xe8] sm:$0xff]
  %v303 = vld [vmem:[%s3 + $0xf0] sm:$0xff]
  %v304 = vld [vmem:[%s3 + $0xf8] sm:$0xff]
  %v305 = vld [vmem:[%s4] sm:$0x1]
  %v307 = vlaneseq
  %v308 = vshrl.u32 %v307, 7
  %v309 = vsub.s32 0, %v308
  %v310 = vrot.slane %v305, %v309
  %312 = vmatprep.subr.mxu0 0.0
  %313 = vmatpush1.msra.mxu0 %v273
  %314 = vmatprep.subr.mxu0 0.0
  %315 = vmatpush1.msra.mxu0 %v274
  %316 = vmatprep.subr.mxu0 0.0
  %317 = vmatpush1.msra.mxu0 %v275
  %318 = vmatprep.subr.mxu0 0.0
  %319 = vmatpush1.msra.mxu0 %v276
  %320 = vmatprep.subr.mxu0 0.0
  %321 = vmatpush1.msra.mxu0 %v277
  %322 = vmatprep.subr.mxu0 0.0
  %323 = vmatpush1.msra.mxu0 %v278
  %324 = vmatprep.subr.mxu0 0.0
  %325 = vmatpush1.msra.mxu0 %v279
  %326 = vmatprep.subr.mxu0 0.0
  %327 = vmatpush1.msra.mxu0 %v280
  %328 = vmatprep.subr.mxu0 0.0
  %329 = vmatpush1.msra.mxu0 %v281
  %330 = vmatprep.subr.mxu0 0.0
  %331 = vmatpush1.msra.mxu0 %v282
  %332 = vmatprep.subr.mxu0 0.0
  %333 = vmatpush1.msra.mxu0 %v283
  %334 = vmatprep.subr.mxu0 0.0
  %335 = vmatpush1.msra.mxu0 %v284
  %336 = vmatprep.subr.mxu0 0.0
  %337 = vmatpush1.msra.mxu0 %v285
  %338 = vmatprep.subr.mxu0 0.0
  %339 = vmatpush1.msra.mxu0 %v286
  %340 = vmatprep.subr.mxu0 0.0
  %341 = vmatpush1.msra.mxu0 %v287
  %342 = vmatprep.subr.mxu0 0.0
  %343 = vmatpush1.msra.mxu0 %v288
  %344 = vmatprep.subr.mxu0 0.0
  %345 = vmatpush1.msra.mxu0 %v289
  %346 = vmatprep.subr.mxu0 0.0
  %347 = vmatpush1.msra.mxu0 %v290
  %348 = vmatprep.subr.mxu0 0.0
  %349 = vmatpush1.msra.mxu0 %v291
  %350 = vmatprep.subr.mxu0 0.0
  %351 = vmatpush1.msra.mxu0 %v292
  %352 = vmatprep.subr.mxu0 0.0
  %353 = vmatpush1.msra.mxu0 %v293
  %354 = vmatprep.subr.mxu0 0.0
  %355 = vmatpush1.msra.mxu0 %v294
  %356 = vmatprep.subr.mxu0 0.0
  %357 = vmatpush1.msra.mxu0 %v295
  %358 = vmatprep.subr.mxu0 0.0
  %359 = vmatpush1.msra.mxu0 %v296
  %360 = vmatprep.subr.mxu0 0.0
  %361 = vmatpush1.msra.mxu0 %v297
  %362 = vmatprep.subr.mxu0 0.0
  %363 = vmatpush1.msra.mxu0 %v298
  %364 = vmatprep.subr.mxu0 0.0
  %365 = vmatpush1.msra.mxu0 %v299
  %366 = vmatprep.subr.mxu0 0.0
  %367 = vmatpush1.msra.mxu0 %v300
  %368 = vmatprep.subr.mxu0 0.0
  %369 = vmatpush1.msra.mxu0 %v301
  %370 = vmatprep.subr.mxu0 0.0
  %371 = vmatpush1.msra.mxu0 %v302
  %372 = vmatprep.subr.mxu0 0.0
  %373 = vmatpush1.msra.mxu0 %v303
  %374 = vmatprep.subr.mxu0 0.0
  %375 = vmatpush1.msra.mxu0 %v304
  %376 = vmatprep.mubr.f32.mxu0 %v242
  %377 = vmatmul.mubr.f32.gmra.mrb[0].mxu0 %v241
  %v378 = vpop.f32.mrb[0].mxu0
  %v379 = vadd.f32 %v310, %v378
  %v380 = vpop.f32.mrb[0].mxu0
  %381 = vmatprep.mubr.f32.mxu0 %v244
  %382 = vmatmul.mubr.f32.gmra.mrb[0].mxu0 %v243
  %v383 = vpop.f32.mrb[0].mxu0
  %v384 = vadd.f32 %v310, %v383
  %v385 = vpop.f32.mrb[0].mxu0
  %386 = vmatprep.mubr.f32.mxu0 %v246
  %387 = vmatmul.mubr.f32.gmra.mrb[0].mxu0 %v245
  %v388 = vpop.f32.mrb[0].mxu0
  %v389 = vadd.f32 %v310, %v388
  %v390 = vpop.f32.mrb[0].mxu0
  %391 = vmatprep.mubr.f32.mxu0 %v248
  %392 = vmatmul.mubr.f32.gmra.mrb[0].mxu0 %v247
  %v393 = vpop.f32.mrb[0].mxu0
  %v394 = vadd.f32 %v310, %v393
  %v395 = vpop.f32.mrb[0].mxu0
  %396 = vmatprep.mubr.f32.mxu0 %v250
  %397 = vmatmul.mubr.f32.gmra.mrb[0].mxu0 %v249
  %v398 = vpop.f32.mrb[0].mxu0
  %v399 = vadd.f32 %v310, %v398
  %v400 = vpop.f32.mrb[0].mxu0
  %401 = vmatprep.mubr.f32.mxu0 %v252
  %402 = vmatmul.mubr.f32.gmra.mrb[0].mxu0 %v251
  %v403 = vpop.f32.mrb[0].mxu0
  %v404 = vadd.f32 %v310, %v403
  %v405 = vpop.f32.mrb[0].mxu0
  %406 = vmatprep.mubr.f32.mxu0 %v254
  %407 = vmatmul.mubr.f32.gmra.mrb[0].mxu0 %v253
  %v408 = vpop.f32.mrb[0].mxu0
  %v409 = vadd.f32 %v310, %v408
  %v410 = vpop.f32.mrb[0].mxu0
  %411 = vmatprep.mubr.f32.mxu0 %v256
  %412 = vmatmul.mubr.f32.gmra.mrb[0].mxu0 %v255
  %v413 = vpop.f32.mrb[0].mxu0
  %v414 = vadd.f32 %v310, %v413
  %v415 = vpop.f32.mrb[0].mxu0
  %416 = vmatprep.mubr.f32.mxu0 %v258
  %417 = vmatmul.mubr.f32.gmra.mrb[0].mxu0 %v257
  %v418 = vpop.f32.mrb[0].mxu0
  %v419 = vadd.f32 %v310, %v418
  %v420 = vpop.f32.mrb[0].mxu0
  %421 = vmatprep.mubr.f32.mxu0 %v260
  %422 = vmatmul.mubr.f32.gmra.mrb[0].mxu0 %v259
  %v423 = vpop.f32.mrb[0].mxu0
  %v424 = vadd.f32 %v310, %v423
  %v425 = vpop.f32.mrb[0].mxu0
  %426 = vmatprep.mubr.f32.mxu0 %v262
  %427 = vmatmul.mubr.f32.gmra.mrb[0].mxu0 %v261
  %v428 = vpop.f32.mrb[0].mxu0
  %v429 = vadd.f32 %v310, %v428
  %v430 = vpop.f32.mrb[0].mxu0
  %431 = vmatprep.mubr.f32.mxu0 %v264
  %432 = vmatmul.mubr.f32.gmra.mrb[0].mxu0 %v263
  %v433 = vpop.f32.mrb[0].mxu0
  %v434 = vadd.f32 %v310, %v433
  %v435 = vpop.f32.mrb[0].mxu0
  %436 = vmatprep.mubr.f32.mxu0 %v266
  %437 = vmatmul.mubr.f32.gmra.mrb[0].mxu0 %v265
  %v438 = vpop.f32.mrb[0].mxu0
  %v439 = vadd.f32 %v310, %v438
  %v440 = vpop.f32.mrb[0].mxu0
  %441 = vmatprep.mubr.f32.mxu0 %v268
  %442 = vmatmul.mubr.f32.gmra.mrb[0].mxu0 %v267
  %v443 = vpop.f32.mrb[0].mxu0
  %v444 = vadd.f32 %v310, %v443
  %v445 = vpop.f32.mrb[0].mxu0
  %446 = vmatprep.mubr.f32.mxu0 %v270
  %447 = vmatmul.mubr.f32.gmra.mrb[0].mxu0 %v269
  %v448 = vpop.f32.mrb[0].mxu0
  %v449 = vadd.f32 %v310, %v448
  %v450 = vpop.f32.mrb[0].mxu0
  %451 = vmatprep.mubr.f32.mxu0 %v272
  %452 = vmatmul.mubr.f32.gmra.mrb[0].mxu0 %v271
  %v453 = vpop.f32.mrb[0].mxu0
  %v454 = vadd.f32 %v310, %v453
  %v455 = vpop.f32.mrb[0].mxu0
  %456 = vdwg.mxu0
  %457 = vst [vmem:[%s5] sm:$0xff] %v379
  %458 = vst [vmem:[%s5 + $0x8] sm:$0xff] %v384
  %459 = vst [vmem:[%s5 + $0x10] sm:$0xff] %v389
  %460 = vst [vmem:[%s5 + $0x18] sm:$0xff] %v394
  %461 = vst [vmem:[%s5 + $0x20] sm:$0xff] %v399
  %462 = vst [vmem:[%s5 + $0x28] sm:$0xff] %v404
  %463 = vst [vmem:[%s5 + $0x30] sm:$0xff] %v409
  %464 = vst [vmem:[%s5 + $0x38] sm:$0xff] %v414
  %465 = vst [vmem:[%s5 + $0x40] sm:$0xff] %v419
  %466 = vst [vmem:[%s5 + $0x48] sm:$0xff] %v424
  %467 = vst [vmem:[%s5 + $0x50] sm:$0xff] %v429
  %468 = vst [vmem:[%s5 + $0x58] sm:$0xff] %v434
  %469 = vst [vmem:[%s5 + $0x60] sm:$0xff] %v439
  %470 = vst [vmem:[%s5 + $0x68] sm:$0xff] %v444
  %471 = vst [vmem:[%s5 + $0x70] sm:$0xff] %v449
  %472 = vst [vmem:[%s5 + $0x78] sm:$0xff] %v454
  // Predicated region
  $region22: #{mlp_forward.1} parent=0 // pred_check
    _
  $region23: #{mlp_forward.1} parent=0 // pred_check_branch
    %474 = sbr.rel (0) target = $region25
  $region24: #{mlp_forward.1} parent=0 // pred_region
    _
  $region25: #{mlp_forward.1} parent=0 // pred_fallthru
    _
  // Predicated region
  $region26: #{mlp_forward.1} parent=0 // pred_check
    _
  $region27: #{mlp_forward.1} parent=0 // pred_check_branch
    %476 = sbr.rel (0) target = $region29
  $region28: #{mlp_forward.1} parent=0 // pred_region
    _
  $region29: #{mlp_forward.1} parent=0 // pred_fallthru
    _

</llo_original>
